<compile_context>
chip_gen: v7x
topology: tpu7x:2x2x1
jax: 0.10.0
libtpu: 0.0.40
codegen_flags: <defaults>
</compile_context>

<pallas_src>
import functools

import jax
import jax.numpy as jnp
from jax import lax
from jax.experimental import pallas as pl
from jax.experimental.pallas import tpu as pltpu

ALPHA = 0.3
GAMMA = 2.0


def _pow(x, gamma):
    """x**gamma, specialized to repeated multiplies (VPU) when gamma is integral."""
    if float(gamma).is_integer():
        return lax.integer_pow(x, int(gamma))  # gamma=2 -> x*x, no EUP transcendentals
    return jnp.power(x, gamma)                 # fallback: exp(gamma*log(x)) on the EUP


def _focal_bce_kernel(p_ref, y_ref, part_ref, *, alpha, gamma):
    p = p_ref[...].astype(jnp.float32)
    y = y_ref[...].astype(jnp.float32)

    # tools.FocalWeight: alpha*(1-p)^gamma for positives, (1-alpha)*p^gamma for negatives.
    # TODO(synk): tools.FocalWeight source unavailable; using the standard focal-weight
    # formulation implied by its (alpha, gamma) constructor.
    one_m_p = 1.0 - p
    weight = (y * (alpha * _pow(one_m_p, gamma))
              + (1.0 - y) * ((1.0 - alpha) * _pow(p, gamma)))

    # F.binary_cross_entropy with per-element weight; PyTorch clamps log terms at -100.
    log_p = jnp.maximum(jnp.log(p), -100.0)
    log_1mp = jnp.maximum(jnp.log(one_m_p), -100.0)
    wl = weight * -(y * log_p + (1.0 - y) * log_1mp)  # (tile_b, L)

    tb, L = wl.shape
    # Sublane-preserving partial reduction: (tile_b, L) -> (tile_b//8, 8, L), sum over the
    # leading axis (element-wise vreg adds on the VPU). One lane-dense (8, L) partial per
    # grid step; the single cross-lane reduce + mean happen in the JAX wrapper.
    part_ref[...] = jnp.sum(wl.reshape(tb // 8, 8, L), axis=0)


def event_detection_focal_loss(probs, labels, *, alpha=ALPHA, gamma=GAMMA,
                               vmem_tile_budget_bytes=8 << 20):
    """probs, labels: (bsz, label_cnt) arrays (probabilities / targets). Returns scalar f32 mean loss."""
    assert probs.ndim == 2 and probs.shape == labels.shape
    bsz, label_cnt = probs.shape
    n_total = bsz * label_cnt
    itemsize = max(jnp.dtype(probs.dtype).itemsize, jnp.dtype(labels.dtype).itemsize)

    # Tile rows: largest multiple of 8 such that 2 inputs x 2 pipeline buffers of the tile
    # fit within the (cross-generation safe) budget; clamp to a single grid step for small bsz.
    max_rows = vmem_tile_budget_bytes // (4 * label_cnt * itemsize)
    max_rows = max(8, (max_rows // 8) * 8)
    tile_b = min(max_rows, ((bsz + 7) // 8) * 8)

    # Pad the batch up to a multiple of tile_b with neutral rows (p=1, y=1 => weight=0 and
    # bce=0), so padded rows contribute exactly 0 to the sum; mean still divides by n_total.
    padded_b = pl.cdiv(bsz, tile_b) * tile_b
    if padded_b != bsz:
        pad = padded_b - bsz
        probs = jnp.concatenate(
            [probs, jnp.ones((pad, label_cnt), probs.dtype)], axis=0)
        labels = jnp.concatenate(
            [labels, jnp.ones((pad, label_cnt), labels.dtype)], axis=0)
    grid_n = padded_b // tile_b

    kernel = functools.partial(_focal_bce_kernel, alpha=alpha, gamma=gamma)

    # Explicit VMEM limit: stay under v5e's 16 MiB default scoped limit when possible and
    # well under v7x's 64 MiB physical VMEM even for large tiles.
    tile_bytes = tile_b * label_cnt * itemsize
    vmem_limit = int(min(max(6 * tile_bytes, 16 << 20), 48 << 20))

    partials = pl.pallas_call(
        kernel,
        out_shape=jax.ShapeDtypeStruct((grid_n * 8, label_cnt), jnp.float32),
        grid_spec=pltpu.PrefetchScalarGridSpec(
            num_scalar_prefetch=0,
            grid=(grid_n,),
            in_specs=[
                pl.BlockSpec((tile_b, label_cnt), lambda i: (i, 0)),
                pl.BlockSpec((tile_b, label_cnt), lambda i: (i, 0)),
            ],
            out_specs=pl.BlockSpec((8, label_cnt), lambda i: (i, 0)),
        ),
        compiler_params=pltpu.CompilerParams(
            dimension_semantics=("parallel",),  # stateless grid axis -> megacore-shardable
            vmem_limit_bytes=vmem_limit,
        ),
    )(probs, labels)

    # One cross-lane reduce + mean over a tiny (grid_n*8, label_cnt) array.
    return jnp.sum(partials) / jnp.float32(n_total)


def _reference(probs, labels, alpha=ALPHA, gamma=GAMMA):
    p = probs.astype(jnp.float32)
    y = labels.astype(jnp.float32)
    w = y * alpha * _pow(1.0 - p, gamma) + (1.0 - y) * (1.0 - alpha) * _pow(p, gamma)
    bce = -(y * jnp.maximum(jnp.log(p), -100.0)
            + (1.0 - y) * jnp.maximum(jnp.log(1.0 - p), -100.0))
    return jnp.mean(w * bce)


if __name__ == "__main__":
    key = jax.random.PRNGKey(0)
    k1, k2 = jax.random.split(key)

    bsz, label_cnt = 16, 128
    # "logits" in the module are already probabilities (sigmoid outputs upstream).
    probs = jax.nn.sigmoid(jax.random.normal(k1, (bsz, label_cnt), dtype=jnp.float32))
    labels = (jax.random.uniform(k2, (bsz, label_cnt)) < 0.1).astype(jnp.float32)

    loss = event_detection_focal_loss(probs, labels)
    loss = jax.block_until_ready(loss)

    ref = _reference(probs, labels)
    assert jnp.allclose(loss, ref, rtol=1e-5, atol=1e-6), (loss, ref)
    print("KERNEL_OK")
</pallas_src>

<mosaic_0001>
module attributes {stable_mosaic.version = 11 : i64} {
  func.func @_focal_bce_kernel(%arg0: i32, %arg1: memref<16x128xf32, #tpu.memory_space<vmem>>, %arg2: memref<16x128xf32, #tpu.memory_space<vmem>>, %arg3: memref<8x128xf32, #tpu.memory_space<vmem>>) attributes {dimension_semantics = [#tpu.dimension_semantics<parallel>], iteration_bounds = array<i64: 1>, scalar_prefetch = 0 : i64, scratch_operands = 0 : i64, tpu.core_type = #tpu.core_type<tc>, window_params = [{transform_indices = @transform_0, window_bounds = array<i64: 16, 128>}, {transform_indices = @transform_1, window_bounds = array<i64: 16, 128>}, {transform_indices = @transform_2, window_bounds = array<i64: 8, 128>}]} {
    %c0 = arith.constant 0 : index
    %c0_0 = arith.constant 0 : index
    %0 = vector.load %arg1[%c0, %c0_0] : memref<16x128xf32, #tpu.memory_space<vmem>>, vector<16x128xf32>
    %c0_1 = arith.constant 0 : index
    %c0_2 = arith.constant 0 : index
    %1 = vector.load %arg2[%c0_1, %c0_2] : memref<16x128xf32, #tpu.memory_space<vmem>>, vector<16x128xf32>
    %cst = arith.constant 1.000000e+00 : f32
    %2 = vector.broadcast %cst : f32 to vector<16x128xf32>
    %3 = arith.subf %2, %0 : vector<16x128xf32>
    %4 = arith.mulf %3, %3 : vector<16x128xf32>
    %cst_3 = arith.constant 3.000000e-01 : f32
    %5 = vector.broadcast %cst_3 : f32 to vector<16x128xf32>
    %6 = arith.mulf %5, %4 : vector<16x128xf32>
    %7 = arith.mulf %1, %6 : vector<16x128xf32>
    %cst_4 = arith.constant 1.000000e+00 : f32
    %8 = vector.broadcast %cst_4 : f32 to vector<16x128xf32>
    %9 = arith.subf %8, %1 : vector<16x128xf32>
    %10 = arith.mulf %0, %0 : vector<16x128xf32>
    %cst_5 = arith.constant 0.699999988 : f32
    %11 = vector.broadcast %cst_5 : f32 to vector<16x128xf32>
    %12 = arith.mulf %11, %10 : vector<16x128xf32>
    %13 = arith.mulf %9, %12 : vector<16x128xf32>
    %14 = arith.addf %7, %13 : vector<16x128xf32>
    %15 = math.log %0 : vector<16x128xf32>
    %cst_6 = arith.constant -1.000000e+02 : f32
    %16 = vector.broadcast %cst_6 : f32 to vector<16x128xf32>
    %17 = arith.maximumf %15, %16 : vector<16x128xf32>
    %18 = math.log %3 : vector<16x128xf32>
    %cst_7 = arith.constant -1.000000e+02 : f32
    %19 = vector.broadcast %cst_7 : f32 to vector<16x128xf32>
    %20 = arith.maximumf %18, %19 : vector<16x128xf32>
    %21 = arith.mulf %1, %17 : vector<16x128xf32>
    %cst_8 = arith.constant 1.000000e+00 : f32
    %22 = vector.broadcast %cst_8 : f32 to vector<16x128xf32>
    %23 = arith.subf %22, %1 : vector<16x128xf32>
    %24 = arith.mulf %23, %20 : vector<16x128xf32>
    %25 = arith.addf %21, %24 : vector<16x128xf32>
    %cst_9 = arith.constant 0.000000e+00 : f32
    %26 = vector.broadcast %cst_9 : f32 to vector<16x128xf32>
    %27 = arith.subf %26, %25 : vector<16x128xf32>
    %28 = arith.mulf %14, %27 : vector<16x128xf32>
    %29 = vector.shape_cast %28 : vector<16x128xf32> to vector<2x8x128xf32>
    %cst_10 = arith.constant dense<0.000000e+00> : vector<8x128xf32>
    %30 = vector.multi_reduction <add>, %29, %cst_10 [0] : vector<2x8x128xf32> to vector<8x128xf32>
    %c0_11 = arith.constant 0 : index
    %c0_12 = arith.constant 0 : index
    %31 = vector.load %arg3[%c0_11, %c0_12] : memref<8x128xf32, #tpu.memory_space<vmem>>, vector<8x128xf32>
    tpu.vector_store %arg3[%c0_11, %c0_12], %30 {strides = array<i32>} : memref<8x128xf32, #tpu.memory_space<vmem>>, vector<8x128xf32>,
    return
  }
  func.func @transform_0(%arg0: i32) -> (i32, i32) {
    %c0_i32 = arith.constant 0 : i32
    %c0_i32_0 = arith.constant 0 : i32
    return %arg0, %c0_i32 : i32, i32
  }
  func.func @transform_1(%arg0: i32) -> (i32, i32) {
    %c0_i32 = arith.constant 0 : i32
    %c0_i32_0 = arith.constant 0 : i32
    return %arg0, %c0_i32 : i32, i32
  }
  func.func @transform_2(%arg0: i32) -> (i32, i32) {
    %c0_i32 = arith.constant 0 : i32
    %c0_i32_0 = arith.constant 0 : i32
    return %arg0, %c0_i32 : i32, i32
  }
}

</mosaic_0001>

<llo_original>
// kernel: tpu_custom_call.1
$region0: #{tpu_custom_call.1}
  #allocation0 [shape = 'u32[]', space=smem, size = 0x4, offset = 0x4, fixed_abs, tag = 'smem constant byte address 0x4 - core index']
  #allocation1 [shape = 'u32[144,128]{1,0:T(1,128)}', space=vmem, size = 0x12000, scoped, tag = 'internal scratch']
  %s0 = inlined_call_operand.hbm [shape: f32[16,128], index: 0, kind: input, shape index: {}]
  %s1 = inlined_call_operand.hbm [shape: f32[16,128], index: 1, kind: input, shape index: {}]
  %s2 = inlined_call_operand.hbm [shape: f32[8,128], index: 2, kind: output, shape index: {}]
  %s3 = sld [smem:[#allocation0]]
  $region26: #{tpu_custom_call.1} parent=0
    _
  %s5 = ssub.s32 1, %s3
  %s6 = scalar_select 0, %s5, %s3
  $region1: #{tpu_custom_call.1} parent=0
    #allocation2 [shape = 'u8[8192]{0}', space=vmem, size = 0x2000, scoped, tag = 'input window, operand 0, single buffered']
    #allocation3 [shape = 's32[1]{0}', space=sflag, size = 0x4, scoped, tag = 'scoped memory for tpu_custom_call.1']
    #allocation4 [shape = 's32[1]{0}', space=sflag, size = 0x4, scoped, tag = 'scoped memory for tpu_custom_call.1']
    #allocation5 [shape = 'u8[8192]{0}', space=vmem, size = 0x2000, scoped, tag = 'input window, operand 1, single buffered']
    #allocation6 [shape = 's32[1]{0}', space=sflag, size = 0x4, scoped, tag = 'scoped memory for tpu_custom_call.1']
    #allocation7 [shape = 'u8[4096]{0}', space=vmem, size = 0x1000, scoped, tag = 'output window, operand 0, single buffered']
    %7 = vsyncpa [#allocation3], 0
    %8 = vsyncpa [#allocation6], 0
    %9 = vsyncpa [#allocation4], 0
    // Predicated region
    $region2: #{tpu_custom_call.1} parent=1 // pred_check
      _
    $region3: #{tpu_custom_call.1} parent=1 // pred_check_branch
      %11 = sbr.rel (0) target = $region5
    $region4: #{tpu_custom_call.1} parent=1 // pred_region
      %s13 = ssub.s32 256, 256
      %14 = vsyncadd [#allocation3], %s13
      %s15 = sshll.u32 [#allocation2], 4
      %s16 = int_to_ptr.vmem [resolvable:$true] %s15
      %21 = dma.hbm_to_vmem [thread:$0]  %s0, 256, %s16, [#allocation3], 128, 128, 8
    $region5: #{tpu_custom_call.1} parent=1 // pred_fallthru
      _
    // Predicated region
    $region6: #{tpu_custom_call.1} parent=1 // pred_check
      _
    $region7: #{tpu_custom_call.1} parent=1 // pred_check_branch
      %23 = sbr.rel (0) target = $region9
    $region8: #{tpu_custom_call.1} parent=1 // pred_region
      %s25 = ssub.s32 256, 256
      %26 = vsyncadd [#allocation6], %s25
      %s27 = sshll.u32 [#allocation5], 4
      %s28 = int_to_ptr.vmem [resolvable:$true] %s27
      %33 = dma.hbm_to_vmem [thread:$0]  %s1, 256, %s28, [#allocation6], 128, 128, 8
    $region9: #{tpu_custom_call.1} parent=1 // pred_fallthru
      _
    // Predicated region
    $region10: #{tpu_custom_call.1} parent=1 // pred_check
      _
    $region11: #{tpu_custom_call.1} parent=1 // pred_check_branch
      %35 = sbr.rel (0) target = $region13
    $region12: #{tpu_custom_call.1} parent=1 // pred_region
      %36 = dma.done [#allocation3], 256
    $region13: #{tpu_custom_call.1} parent=1 // pred_fallthru
      _
    // Predicated region
    $region14: #{tpu_custom_call.1} parent=1 // pred_check
      _
    $region15: #{tpu_custom_call.1} parent=1 // pred_check_branch
      %38 = sbr.rel (0) target = $region17
    $region16: #{tpu_custom_call.1} parent=1 // pred_region
      %39 = dma.done [#allocation6], 256
    $region17: #{tpu_custom_call.1} parent=1 // pred_fallthru
      _
    %v40 = vld [vmem:[#allocation2] sm:$0xff]
    %v41 = vld [vmem:[#allocation2 + $0x8] sm:$0xff]
    %v42 = vld [vmem:[#allocation5] sm:$0xff]
    %v43 = vld [vmem:[#allocation5 + $0x8] sm:$0xff]
    %v44 = vsub.f32 1.0, %v40
    %v45 = vsub.f32 1.0, %v41
    %v46 = vmul.f32 %v44, %v44
    %v47 = vmul.f32 %v45, %v45
    %v48 = vmul.f32 %v46, 0.3
    %v49 = vmul.f32 %v47, 0.3
    %v50 = vmul.f32 %v42, %v48
    %v51 = vmul.f32 %v43, %v49
    %v52 = vsub.f32 1.0, %v42
    %v53 = vsub.f32 1.0, %v43
    %v54 = vmul.f32 %v40, %v40
    %v55 = vmul.f32 %v41, %v41
    %v56 = vmul.f32 %v54, 0.7
    %v57 = vmul.f32 %v55, 0.7
    %v58 = vmul.f32 %v52, %v56
    %v59 = vmul.f32 %v53, %v57
    %v60 = vadd.f32 %v50, %v58
    %v61 = vadd.f32 %v51, %v59
    %v62 = vlog2.pop %v40
    %v63 = vmul.f32 %v62, 0.6931472
    %v64 = vlog2.pop %v41
    %v65 = vmul.f32 %v64, 0.6931472
    %v66 = vmax.f32 %v63, -100.0
    %v67 = vmax.f32 %v65, -100.0
    %v68 = vlog2.pop %v44
    %v69 = vmul.f32 %v68, 0.6931472
    %v70 = vlog2.pop %v45
    %v71 = vmul.f32 %v70, 0.6931472
    %v72 = vmax.f32 %v69, -100.0
    %v73 = vmax.f32 %v71, -100.0
    %v74 = vmul.f32 %v42, %v66
    %v75 = vmul.f32 %v43, %v67
    %v76 = vmul.f32 %v52, %v72
    %v77 = vmul.f32 %v53, %v73
    %v78 = vadd.f32 %v74, %v76
    %v79 = vadd.f32 %v75, %v77
    %v80 = vsub.f32 0.0, %v78
    %v81 = vsub.f32 0.0, %v79
    %v82 = vmul.f32 %v60, %v80
    %v83 = vmul.f32 %v61, %v81
    %v84 = vadd.f32 %v82, %v83
    %85 = vst [vmem:[#allocation7] sm:$0xff] %v84
    // Predicated region
    $region18: #{tpu_custom_call.1} parent=1 // pred_check
      _
    $region19: #{tpu_custom_call.1} parent=1 // pred_check_branch
      %87 = sbr.rel (0) target = $region21
    $region20: #{tpu_custom_call.1} parent=1 // pred_region
      %s89 = ssub.s32 128, 128
      %90 = vsyncadd [#allocation4], %s89
      %s92 = sshll.u32 [#allocation7], 4
      %s93 = int_to_ptr.vmem [resolvable:$true] %s92
      %95 = dma.vmem_to_hbm [thread:$0]  %s93, 128, %s2, [#allocation4]
    $region21: #{tpu_custom_call.1} parent=1 // pred_fallthru
      _
    // Predicated region
    $region22: #{tpu_custom_call.1} parent=1 // pred_check
      _
    $region23: #{tpu_custom_call.1} parent=1 // pred_check_branch
      %97 = sbr.rel (0) target = $region25
    $region24: #{tpu_custom_call.1} parent=1 // pred_region
      %98 = dma.done [#allocation4], 128
    $region25: #{tpu_custom_call.1} parent=1 // pred_fallthru
      _
    %99 = vsyncpa [#allocation3], 1
    %100 = vsyncpa [#allocation6], 1
    %101 = vsyncpa [#allocation4], 1

</llo_original>
